<compile_context>
chip_gen: v6e
topology: v6e:2x2x1
jax: 0.10.0
libtpu: 0.0.40
codegen_flags: <defaults>
</compile_context>

<pallas_src>
import functools

import jax
import jax.numpy as jnp
from jax.experimental import pallas as pl
from jax.experimental.pallas import tpu as pltpu

_LANE = 128


def _select_budgets():
    """Generation-aware (x_block_budget_bytes, vmem_limit_bytes)."""
    try:
        vmem_cap = pltpu.get_tpu_info().vmem_capacity_bytes
    except Exception:
        # Unknown chip: conservative but still much larger than the old 4 MiB.
        return 8 * 1024 * 1024, 40 * 1024 * 1024
    if vmem_cap <= 80 * 1024 * 1024:
        # v7x-class: 64 MiB VMEM per TC, ~3.2 TB/s HBM.
        return 12 * 1024 * 1024, 48 * 1024 * 1024
    # v5e / v6e: 128 MiB VMEM.
    return 16 * 1024 * 1024, 64 * 1024 * 1024


def _make_single_tile_kernel(HW):
    """Whole spatial extent (possibly several batch samples) in one block."""
    inv_hw = 1.0 / HW

    def kernel(x_ref, avg_ref, max_ref):
        xb = x_ref[...].astype(jnp.float32)                      # (bN, C, HW)
        avg = jnp.sum(xb, axis=2) * jnp.float32(inv_hw)          # (bN, C)
        mxv = jnp.max(xb, axis=2)                                # (bN, C)
        avg_ref[...] = jnp.expand_dims(avg, 1)                   # (bN, 1, C)
        max_ref[...] = jnp.expand_dims(mxv, 1)

    return kernel


def _make_multi_tile_kernel(C, HW, hw_tile, num_hw, needs_mask):
    """One sample per block, reduction over lane-dense spatial tiles."""
    inv_hw = 1.0 / HW
    groups = hw_tile // _LANE

    def kernel(x_ref, avg_ref, max_ref, sum_acc, max_acc):
        k = pl.program_id(1)

        @pl.when(k == 0)
        def _init():
            sum_acc[...] = jnp.zeros(sum_acc.shape, jnp.float32)
            max_acc[...] = jnp.full(max_acc.shape, -jnp.inf, jnp.float32)

        def accumulate(masked):
            xb = x_ref[...].astype(jnp.float32)                  # (1, C, hw_tile)
            if masked:
                lane = jax.lax.broadcasted_iota(jnp.int32, (1, 1, hw_tile), 2)
                valid = (k * hw_tile + lane) < HW                # (1, 1, hw_tile)
                x_sum = jnp.where(valid, xb, 0.0)
                x_max = jnp.where(valid, xb, -jnp.inf)
            else:
                x_sum = xb
                x_max = xb
            # Reduce only the lane-group axis per tile; keep (1, C, 128) partials.
            xs = x_sum.reshape(1, C, groups, _LANE)
            xm = x_max.reshape(1, C, groups, _LANE)
            sum_acc[...] += jnp.sum(xs, axis=2)                              # (1, C, 128)
            max_acc[...] = jnp.maximum(max_acc[...], jnp.max(xm, axis=2))    # (1, C, 128)

        if needs_mask:
            # Only the last (ragged) tile pays for iota + compare + where.
            @pl.when(k < num_hw - 1)
            def _interior():
                accumulate(False)

            @pl.when(k == num_hw - 1)
            def _tail():
                accumulate(True)
        else:
            accumulate(False)

        @pl.when(k == num_hw - 1)
        def _finalize():
            avg = jnp.sum(sum_acc[...], axis=2) * jnp.float32(inv_hw)        # (1, C)
            mxv = jnp.max(max_acc[...], axis=2)                              # (1, C)
            avg_ref[...] = jnp.expand_dims(avg, 1)                           # (1, 1, C)
            max_ref[...] = jnp.expand_dims(mxv, 1)

    return kernel


def _make_mlp_kernel(N):
    """Shared MLP + sigmoid on stacked [avg; max] stats: one M=2N matmul pair."""

    def kernel(s_ref, w1t_ref, w2t_ref, o_ref):
        m = s_ref[...].astype(jnp.float32)                       # (2N, C)
        w1t = w1t_ref[...].astype(jnp.float32)                   # (C, hid)
        w2t = w2t_ref[...].astype(jnp.float32)                   # (hid, C)
        h = jnp.maximum(jnp.dot(m, w1t, preferred_element_type=jnp.float32), 0.0)
        z = jnp.dot(h, w2t, preferred_element_type=jnp.float32)  # (2N, C)
        zsum = z[:N, :] + z[N:, :]                               # fc(avg) + fc(max)
        o_ref[...] = (1.0 / (1.0 + jnp.exp(-zsum))).astype(o_ref.dtype)

    return kernel


def channel_attention_pallas(x, w1, w2, *, block_budget=None):
    """x: (N,C,H,W); w1: (C//16, C, 1, 1); w2: (C, C//16, 1, 1).  Returns (N,C,1,1)."""
    N, C, H, W = x.shape
    hid = w1.shape[0]
    HW = H * W

    auto_budget, vmem_limit = _select_budgets()
    if block_budget is None:
        block_budget = auto_budget

    x3 = x.reshape(N, C, HW)            # contiguous view; fuses under jit
    w1t = w1.reshape(hid, C).T          # (C, hid)
    w2t = w2.reshape(C, hid).T          # (hid, C)

    per_sample = C * HW * x.dtype.itemsize

    if per_sample <= block_budget:
        # Whole sample fits: fold as many batch samples as possible into one block
        # so each grid step is still a multi-MiB DMA.
        bN = 1
        for d in range(1, N + 1):
            if N % d == 0 and d * per_sample <= block_budget:
                bN = d
        hw_tile, num_hw = HW, 1
        kernel = _make_single_tile_kernel(HW)
        scratch = []
    else:
        bN = 1
        bytes_per_col = C * x.dtype.itemsize
        hw_tile = max(_LANE, (block_budget // bytes_per_col) // _LANE * _LANE)
        num_hw = pl.cdiv(HW, hw_tile)
        needs_mask = (HW % hw_tile) != 0
        kernel = _make_multi_tile_kernel(C, HW, hw_tile, num_hw, needs_mask)
        scratch = [pltpu.VMEM((1, C, _LANE), jnp.float32),   # per-channel lane-group sums
                   pltpu.VMEM((1, C, _LANE), jnp.float32)]   # per-channel lane-group maxes

    num_n = N // bN

    # ---- Stage 1: HBM-bound pooling (no weights in this pipeline). ----
    avg_s, max_s = pl.pallas_call(
        kernel,
        out_shape=(jax.ShapeDtypeStruct((N, 1, C), jnp.float32),
                   jax.ShapeDtypeStruct((N, 1, C), jnp.float32)),
        grid_spec=pltpu.PrefetchScalarGridSpec(
            num_scalar_prefetch=0,
            grid=(num_n, num_hw),
            in_specs=[pl.BlockSpec((bN, C, hw_tile), lambda i, k: (i, 0, k))],
            out_specs=[pl.BlockSpec((bN, 1, C), lambda i, k: (i, 0, 0)),
                       pl.BlockSpec((bN, 1, C), lambda i, k: (i, 0, 0))],
            scratch_shapes=scratch,
        ),
        compiler_params=pltpu.CompilerParams(
            dimension_semantics=("parallel", "arbitrary"),
            vmem_limit_bytes=vmem_limit,
        ),
    )(x3)

    # ---- Stage 2: tiny shared MLP + sigmoid on (2N, C) stats. ----
    stats = jnp.concatenate([avg_s.reshape(N, C), max_s.reshape(N, C)], axis=0)  # (2N, C)
    out = pl.pallas_call(
        _make_mlp_kernel(N),
        out_shape=jax.ShapeDtypeStruct((N, C), x.dtype),
        grid=(1,),
        in_specs=[pl.BlockSpec((2 * N, C), lambda i: (0, 0)),
                  pl.BlockSpec((C, hid), lambda i: (0, 0)),
                  pl.BlockSpec((hid, C), lambda i: (0, 0))],
        out_specs=pl.BlockSpec((N, C), lambda i: (0, 0)),
    )(stats, w1t, w2t)

    return out.reshape(N, C, 1, 1)


def channel_attention_ref(x, w1, w2):
    """Pure-JAX reference matching the PyTorch module."""
    N, C, H, W = x.shape
    hid = w1.shape[0]
    xf = x.astype(jnp.float32)
    w1m = w1.reshape(hid, C).astype(jnp.float32)
    w2m = w2.reshape(C, hid).astype(jnp.float32)
    avg = jnp.mean(xf, axis=(2, 3))     # (N, C)
    mx = jnp.max(xf, axis=(2, 3))       # (N, C)

    def fc(v):
        return jnp.maximum(v @ w1m.T, 0.0) @ w2m.T

    out = jax.nn.sigmoid(fc(avg) + fc(mx))
    return out.reshape(N, C, 1, 1).astype(x.dtype)


if __name__ == "__main__":
    key = jax.random.PRNGKey(0)

    # Test 1: small CBAM-like shape -> single-tile path with batch folding.
    kx, k1, k2 = jax.random.split(key, 3)
    N, C, H, W = 2, 64, 16, 16
    hid = C // 16
    x = jax.random.normal(kx, (N, C, H, W), dtype=jnp.float32)
    w1 = jax.random.normal(k1, (hid, C, 1, 1), dtype=jnp.float32) * 0.2
    w2 = jax.random.normal(k2, (C, hid, 1, 1), dtype=jnp.float32) * 0.2

    ca = jax.jit(channel_attention_pallas)
    y = jax.block_until_ready(ca(x, w1, w2))
    y_ref = channel_attention_ref(x, w1, w2)
    assert y.shape == (N, C, 1, 1) and y.dtype == x.dtype
    assert jnp.allclose(y, y_ref, atol=1e-5, rtol=1e-5)

    # Test 2: force the multi-tile path with a ragged spatial tail (small block
    # budget override) to exercise the predicated-mask reduction pipeline.
    kx2, k12, k22 = jax.random.split(jax.random.PRNGKey(1), 3)
    N2, C2, H2, W2 = 1, 128, 23, 17            # HW = 391 (ragged vs 128-lane tiles)
    hid2 = C2 // 16
    x2 = jax.random.normal(kx2, (N2, C2, H2, W2), dtype=jnp.float32)
    w12 = jax.random.normal(k12, (hid2, C2, 1, 1), dtype=jnp.float32) * 0.2
    w22 = jax.random.normal(k22, (C2, hid2, 1, 1), dtype=jnp.float32) * 0.2

    ca_small = jax.jit(functools.partial(channel_attention_pallas,
                                         block_budget=64 * 1024))
    y2 = jax.block_until_ready(ca_small(x2, w12, w22))
    y2_ref = channel_attention_ref(x2, w12, w22)
    assert y2.shape == (N2, C2, 1, 1) and y2.dtype == x2.dtype
    assert jnp.allclose(y2, y2_ref, atol=1e-5, rtol=1e-5)

    print("KERNEL_OK")
</pallas_src>

<mosaic_0001>
module attributes {stable_mosaic.version = 11 : i64} {
  func.func @kernel(%arg0: i32, %arg1: i32, %arg2: memref<2x64x256xf32, #tpu.memory_space<vmem>>, %arg3: memref<2x1x64xf32, #tpu.memory_space<vmem>>, %arg4: memref<2x1x64xf32, #tpu.memory_space<vmem>>) attributes {dimension_semantics = [#tpu.dimension_semantics<parallel>, #tpu.dimension_semantics<arbitrary>], iteration_bounds = array<i64: 1, 1>, scalar_prefetch = 0 : i64, scratch_operands = 0 : i64, tpu.core_type = #tpu.core_type<tc>, window_params = [{transform_indices = @transform_0, window_bounds = array<i64: 2, 64, 256>}, {transform_indices = @transform_1, window_bounds = array<i64: 2, 1, 64>}, {transform_indices = @transform_2, window_bounds = array<i64: 2, 1, 64>}]} {
    %c0 = arith.constant 0 : index
    %c0_0 = arith.constant 0 : index
    %c0_1 = arith.constant 0 : index
    %0 = vector.load %arg2[%c0, %c0_0, %c0_1] : memref<2x64x256xf32, #tpu.memory_space<vmem>>, vector<2x64x256xf32>
    %cst = arith.constant dense<0.000000e+00> : vector<2x64xf32>
    %1 = vector.multi_reduction <add>, %0, %cst [2] : vector<2x64x256xf32> to vector<2x64xf32>
    %cst_2 = arith.constant 3.906250e-03 : f32
    %2 = vector.broadcast %cst_2 : f32 to vector<2x64xf32>
    %3 = arith.mulf %1, %2 : vector<2x64xf32>
    %cst_3 = arith.constant dense<0xFF800000> : vector<2x64xf32>
    %4 = vector.multi_reduction <maximumf>, %0, %cst_3 [2] : vector<2x64x256xf32> to vector<2x64xf32>
    %5 = vector.shape_cast %3 : vector<2x64xf32> to vector<2x1x64xf32>
    %c0_4 = arith.constant 0 : index
    %c0_5 = arith.constant 0 : index
    %c0_6 = arith.constant 0 : index
    %6 = vector.load %arg3[%c0_4, %c0_5, %c0_6] : memref<2x1x64xf32, #tpu.memory_space<vmem>>, vector<2x1x64xf32>
    tpu.vector_store %arg3[%c0_4, %c0_5, %c0_6], %5 {strides = array<i32>} : memref<2x1x64xf32, #tpu.memory_space<vmem>>, vector<2x1x64xf32>,
    %7 = vector.shape_cast %4 : vector<2x64xf32> to vector<2x1x64xf32>
    %c0_7 = arith.constant 0 : index
    %c0_8 = arith.constant 0 : index
    %c0_9 = arith.constant 0 : index
    %8 = vector.load %arg4[%c0_7, %c0_8, %c0_9] : memref<2x1x64xf32, #tpu.memory_space<vmem>>, vector<2x1x64xf32>
    tpu.vector_store %arg4[%c0_7, %c0_8, %c0_9], %7 {strides = array<i32>} : memref<2x1x64xf32, #tpu.memory_space<vmem>>, vector<2x1x64xf32>,
    return
  }
  func.func @transform_0(%arg0: i32, %arg1: i32) -> (i32, i32, i32) {
    %c0_i32 = arith.constant 0 : i32
    %c0_i32_0 = arith.constant 0 : i32
    return %arg0, %c0_i32, %arg1 : i32, i32, i32
  }
  func.func @transform_1(%arg0: i32, %arg1: i32) -> (i32, i32, i32) {
    %c0_i32 = arith.constant 0 : i32
    %c0_i32_0 = arith.constant 0 : i32
    %c0_i32_1 = arith.constant 0 : i32
    return %arg0, %c0_i32, %c0_i32_0 : i32, i32, i32
  }
  func.func @transform_2(%arg0: i32, %arg1: i32) -> (i32, i32, i32) {
    %c0_i32 = arith.constant 0 : i32
    %c0_i32_0 = arith.constant 0 : i32
    %c0_i32_1 = arith.constant 0 : i32
    return %arg0, %c0_i32, %c0_i32_0 : i32, i32, i32
  }
}

module attributes {stable_mosaic.version = 11 : i64} {
  func.func @kernel(%arg0: i32, %arg1: memref<4x64xf32, #tpu.memory_space<vmem>>, %arg2: memref<64x4xf32, #tpu.memory_space<vmem>>, %arg3: memref<4x64xf32, #tpu.memory_space<vmem>>, %arg4: memref<2x64xf32, #tpu.memory_space<vmem>>) attributes {dimension_semantics = [#tpu.dimension_semantics<arbitrary>], iteration_bounds = array<i64: 1>, scalar_prefetch = 0 : i64, scratch_operands = 0 : i64, tpu.core_type = #tpu.core_type<tc>, window_params = [{pipeline_mode = #tpu.pipeline_mode<synchronous>, transform_indices = @transform_0, window_bounds = array<i64: 4, 64>}, {pipeline_mode = #tpu.pipeline_mode<synchronous>, transform_indices = @transform_1, window_bounds = array<i64: 64, 4>}, {pipeline_mode = #tpu.pipeline_mode<synchronous>, transform_indices = @transform_2, window_bounds = array<i64: 4, 64>}, {pipeline_mode = #tpu.pipeline_mode<synchronous>, transform_indices = @transform_3, window_bounds = array<i64: 2, 64>}]} {
    %c0 = arith.constant 0 : index
    %c0_0 = arith.constant 0 : index
    %0 = vector.load %arg1[%c0, %c0_0] : memref<4x64xf32, #tpu.memory_space<vmem>>, vector<4x64xf32>
    %c0_1 = arith.constant 0 : index
    %c0_2 = arith.constant 0 : index
    %1 = vector.load %arg2[%c0_1, %c0_2] : memref<64x4xf32, #tpu.memory_space<vmem>>, vector<64x4xf32>
    %c0_3 = arith.constant 0 : index
    %c0_4 = arith.constant 0 : index
    %2 = vector.load %arg3[%c0_3, %c0_4] : memref<4x64xf32, #tpu.memory_space<vmem>>, vector<4x64xf32>
    %cst = arith.constant dense<0.000000e+00> : vector<4x4xf32>
    %3 = tpu.matmul %0, %1, %cst {dimension_numbers = #tpu.dot_dimension_numbers<[1], [0], [0], [1], [0, 0, 1, 1], [], []>} : vector<4x64xf32>, vector<64x4xf32>, vector<4x4xf32> -> vector<4x4xf32>
    %cst_5 = arith.constant 0.000000e+00 : f32
    %4 = vector.broadcast %cst_5 : f32 to vector<4x4xf32>
    %5 = arith.maximumf %3, %4 : vector<4x4xf32>
    %cst_6 = arith.constant dense<0.000000e+00> : vector<4x64xf32>
    %6 = tpu.matmul %5, %2, %cst_6 {dimension_numbers = #tpu.dot_dimension_numbers<[1], [0], [0], [1], [0, 0, 1, 1], [], []>} : vector<4x4xf32>, vector<4x64xf32>, vector<4x64xf32> -> vector<4x64xf32>
    %7 = vector.extract_strided_slice %6 {offsets = [0, 0], sizes = [2, 64], strides = [1, 1]} : vector<4x64xf32> to vector<2x64xf32>
    %8 = vector.extract_strided_slice %6 {offsets = [2, 0], sizes = [2, 64], strides = [1, 1]} : vector<4x64xf32> to vector<2x64xf32>
    %9 = arith.addf %7, %8 : vector<2x64xf32>
    %cst_7 = arith.constant 0.000000e+00 : f32
    %10 = vector.broadcast %cst_7 : f32 to vector<2x64xf32>
    %11 = arith.subf %10, %9 : vector<2x64xf32>
    %12 = math.exp %11 : vector<2x64xf32>
    %cst_8 = arith.constant 1.000000e+00 : f32
    %13 = vector.broadcast %cst_8 : f32 to vector<2x64xf32>
    %14 = arith.addf %13, %12 : vector<2x64xf32>
    %cst_9 = arith.constant 1.000000e+00 : f32
    %15 = vector.broadcast %cst_9 : f32 to vector<2x64xf32>
    %16 = arith.divf %15, %14 : vector<2x64xf32>
    %c0_10 = arith.constant 0 : index
    %c0_11 = arith.constant 0 : index
    %17 = vector.load %arg4[%c0_10, %c0_11] : memref<2x64xf32, #tpu.memory_space<vmem>>, vector<2x64xf32>
    tpu.vector_store %arg4[%c0_10, %c0_11], %16 {strides = array<i32>} : memref<2x64xf32, #tpu.memory_space<vmem>>, vector<2x64xf32>,
    return
  }
  func.func @transform_0(%arg0: i32) -> (i32, i32) {
    %c0_i32 = arith.constant 0 : i32
    %c0_i32_0 = arith.constant 0 : i32
    %c0_i32_1 = arith.constant 0 : i32
    return %c0_i32, %c0_i32_0 : i32, i32
  }
  func.func @transform_1(%arg0: i32) -> (i32, i32) {
    %c0_i32 = arith.constant 0 : i32
    %c0_i32_0 = arith.constant 0 : i32
    %c0_i32_1 = arith.constant 0 : i32
    return %c0_i32, %c0_i32_0 : i32, i32
  }
  func.func @transform_2(%arg0: i32) -> (i32, i32) {
    %c0_i32 = arith.constant 0 : i32
    %c0_i32_0 = arith.constant 0 : i32
    %c0_i32_1 = arith.constant 0 : i32
    return %c0_i32, %c0_i32_0 : i32, i32
  }
  func.func @transform_3(%arg0: i32) -> (i32, i32) {
    %c0_i32 = arith.constant 0 : i32
    %c0_i32_0 = arith.constant 0 : i32
    %c0_i32_1 = arith.constant 0 : i32
    return %c0_i32, %c0_i32_0 : i32, i32
  }
}

</mosaic_0001>

<llo_original>
// kernel: channel_attention_pallas.3
$region0: #{channel_attention_pallas.3}
  #allocation0 [shape = 'u32[]', space=smem, size = 0x4, offset = 0x4, fixed_abs, tag = 'smem constant byte address 0x4 - core index']
  #allocation1 [shape = 'u32[144,128]{1,0:T(1,128)}', space=vmem, size = 0x12000, scoped, tag = 'internal scratch']
  %s0 = inlined_call_operand.vmem [shape: f32[4,64], index: 0, kind: input, shape index: {}]
  %s1 = inlined_call_operand.vmem [shape: f32[64,4], index: 1, kind: input, shape index: {}]
  %s2 = inlined_call_operand.vmem [shape: f32[4,64], index: 2, kind: input, shape index: {}]
  %s3 = inlined_call_operand.hbm [shape: f32[2,64], index: 3, kind: output, shape index: {}]
  %s4 = sld [smem:[#allocation0]]
  $region22: #{channel_attention_pallas.3} parent=0
    _
  %s6 = ssub.s32 1, %s4
  %s7 = scalar_select 0, %s6, %s4
  $region1: #{channel_attention_pallas.3} parent=0
    #allocation2 [shape = 'u8[1024]{0}', space=vmem, size = 0x400, scoped, tag = 'output window, operand 0, single buffered']
    #allocation3 [shape = 's32[1]{0}', space=sflag, size = 0x4, scoped, tag = 'scoped memory for channel_attention_pallas.3']
    %8 = vsyncpa [#allocation3], 0
    // Predicated region
    $region2: #{channel_attention_pallas.3} parent=1 // pred_check
      _
    $region3: #{channel_attention_pallas.3} parent=1 // pred_check_branch
      %10 = sbr.rel (0) target = $region5
    $region4: #{channel_attention_pallas.3} parent=1 // pred_region
      _
    $region5: #{channel_attention_pallas.3} parent=1 // pred_fallthru
      _
    // Predicated region
    $region6: #{channel_attention_pallas.3} parent=1 // pred_check
      _
    $region7: #{channel_attention_pallas.3} parent=1 // pred_check_branch
      %12 = sbr.rel (0) target = $region9
    $region8: #{channel_attention_pallas.3} parent=1 // pred_region
      _
    $region9: #{channel_attention_pallas.3} parent=1 // pred_fallthru
      _
    // Predicated region
    $region10: #{channel_attention_pallas.3} parent=1 // pred_check
      _
    $region11: #{channel_attention_pallas.3} parent=1 // pred_check_branch
      %14 = sbr.rel (0) target = $region13
    $region12: #{channel_attention_pallas.3} parent=1 // pred_region
      _
    $region13: #{channel_attention_pallas.3} parent=1 // pred_fallthru
      _
    %v15 = vld [vmem:[%s0] sm:$0xf]
    %v16 = vld [vmem:[%s1] sm:$0xff]
    %v17 = vld [vmem:[%s1 + $0x8] sm:$0xff]
    %v18 = vld [vmem:[%s1 + $0x10] sm:$0xff]
    %v19 = vld [vmem:[%s1 + $0x18] sm:$0xff]
    %v20 = vld [vmem:[%s1 + $0x20] sm:$0xff]
    %v21 = vld [vmem:[%s1 + $0x28] sm:$0xff]
    %v22 = vld [vmem:[%s1 + $0x30] sm:$0xff]
    %v23 = vld [vmem:[%s1 + $0x38] sm:$0xff]
    %v24 = vld [vmem:[%s2] sm:$0xf]
    %vm25 = vcmask 523264
    %v27 = vsel %vm25, %v15, 0
    %29 = vmatprep.subr.mxu0 0.0
    %30 = vmatpush1.msra.mxu0 0.0
    %31 = vmatprep.subr.mxu0 0.0
    %32 = vmatpush1.msra.mxu0 0.0
    %33 = vmatprep.subr.mxu0 0.0
    %34 = vmatpush1.msra.mxu0 0.0
    %35 = vmatprep.subr.mxu0 0.0
    %36 = vmatpush1.msra.mxu0 0.0
    %37 = vmatprep.subr.mxu0 0.0
    %38 = vmatpush1.msra.mxu0 0.0
    %39 = vmatprep.subr.mxu0 0.0
    %40 = vmatpush1.msra.mxu0 0.0
    %41 = vmatprep.subr.mxu0 0.0
    %42 = vmatpush1.msra.mxu0 0.0
    %43 = vmatprep.subr.mxu0 0.0
    %44 = vmatpush1.msra.mxu0 0.0
    %45 = vmatprep.subr.mxu0 0.0
    %46 = vmatpush1.msra.mxu0 %v23
    %47 = vmatprep.subr.mxu0 0.0
    %48 = vmatpush1.msra.mxu0 %v22
    %49 = vmatprep.subr.mxu0 0.0
    %50 = vmatpush1.msra.mxu0 %v21
    %51 = vmatprep.subr.mxu0 0.0
    %52 = vmatpush1.msra.mxu0 %v20
    %53 = vmatprep.subr.mxu0 0.0
    %54 = vmatpush1.msra.mxu0 %v19
    %55 = vmatprep.subr.mxu0 0.0
    %56 = vmatpush1.msra.mxu0 %v18
    %57 = vmatprep.subr.mxu0 0.0
    %58 = vmatpush1.msra.mxu0 %v17
    %59 = vmatprep.subr.mxu0 0.0
    %60 = vmatpush1.msra.mxu0 %v16
    %61 = vmatprep.subr.mxu0 0.0
    %62 = vmatpush2.msra.mxu0 0.0
    %63 = vmatprep.subr.mxu0 0.0
    %64 = vmatpush2.msra.mxu0 0.0
    %65 = vmatprep.subr.mxu0 0.0
    %66 = vmatpush2.msra.mxu0 0.0
    %67 = vmatprep.subr.mxu0 0.0
    %68 = vmatpush2.msra.mxu0 0.0
    %69 = vmatprep.subr.mxu0 0.0
    %70 = vmatpush2.msra.mxu0 0.0
    %71 = vmatprep.subr.mxu0 0.0
    %72 = vmatpush2.msra.mxu0 0.0
    %73 = vmatprep.subr.mxu0 0.0
    %74 = vmatpush2.msra.mxu0 0.0
    %75 = vmatprep.subr.mxu0 0.0
    %76 = vmatpush2.msra.mxu0 0.0
    %77 = vmatprep.subr.mxu0 0.0
    %78 = vmatpush2.msra.mxu0 0.0
    %79 = vmatprep.subr.mxu0 0.0
    %80 = vmatpush2.msra.mxu0 0.0
    %81 = vmatprep.subr.mxu0 0.0
    %82 = vmatpush2.msra.mxu0 0.0
    %83 = vmatprep.subr.mxu0 0.0
    %84 = vmatpush2.msra.mxu0 0.0
    %85 = vmatprep.subr.mxu0 0.0
    %86 = vmatpush2.msra.mxu0 0.0
    %87 = vmatprep.subr.mxu0 0.0
    %88 = vmatpush2.msra.mxu0 0.0
    %89 = vmatprep.subr.mxu0 0.0
    %90 = vmatpush2.msra.mxu0 0.0
    %91 = vmatprep.subr.mxu0 0.0
    %92 = vmatpush2.msra.mxu0 0.0
    %93 = vmatprep.mubr.f32.mxu0 0.0
    %94 = vmatmul.mubr.f32.gmra.mxu0 %v27
    %v95 = vpop.f32.mrf.mxu0
    %v96 = vadd.f32 0.0, %v95
    %v97 = vpop.f32.mrf.mxu0
    %98 = vdwg.mxu0
    %v99 = vmax.f32 %v96, 0.0
    %vm100 = vcmask 31744
    %v102 = vsel %vm100, %v99, 0
    %vm104 = vcmask 1043456
    %v106 = vsel %vm104, %v24, 0
    %108 = vmatprep.subr.mxu0 0.0
    %109 = vmatpush1.msra.mxu0 0.0
    %110 = vmatprep.subr.mxu0 0.0
    %111 = vmatpush1.msra.mxu0 0.0
    %112 = vmatprep.subr.mxu0 0.0
    %113 = vmatpush1.msra.mxu0 0.0
    %114 = vmatprep.subr.mxu0 0.0
    %115 = vmatpush1.msra.mxu0 0.0
    %116 = vmatprep.subr.mxu0 0.0
    %117 = vmatpush1.msra.mxu0 0.0
    %118 = vmatprep.subr.mxu0 0.0
    %119 = vmatpush1.msra.mxu0 0.0
    %120 = vmatprep.subr.mxu0 0.0
    %121 = vmatpush1.msra.mxu0 0.0
    %122 = vmatprep.subr.mxu0 0.0
    %123 = vmatpush1.msra.mxu0 0.0
    %124 = vmatprep.subr.mxu0 0.0
    %125 = vmatpush1.msra.mxu0 0.0
    %126 = vmatprep.subr.mxu0 0.0
    %127 = vmatpush1.msra.mxu0 0.0
    %128 = vmatprep.subr.mxu0 0.0
    %129 = vmatpush1.msra.mxu0 0.0
    %130 = vmatprep.subr.mxu0 0.0
    %131 = vmatpush1.msra.mxu0 0.0
    %132 = vmatprep.subr.mxu0 0.0
    %133 = vmatpush1.msra.mxu0 0.0
    %134 = vmatprep.subr.mxu0 0.0
    %135 = vmatpush1.msra.mxu0 0.0
    %136 = vmatprep.subr.mxu0 0.0
    %137 = vmatpush1.msra.mxu0 0.0
    %138 = vmatprep.subr.mxu0 0.0
    %139 = vmatpush1.msra.mxu0 %v106
    %140 = vmatprep.subr.mxu0 0.0
    %141 = vmatpush2.msra.mxu0 0.0
    %142 = vmatprep.subr.mxu0 0.0
    %143 = vmatpush2.msra.mxu0 0.0
    %144 = vmatprep.subr.mxu0 0.0
    %145 = vmatpush2.msra.mxu0 0.0
    %146 = vmatprep.subr.mxu0 0.0
    %147 = vmatpush2.msra.mxu0 0.0
    %148 = vmatprep.subr.mxu0 0.0
    %149 = vmatpush2.msra.mxu0 0.0
    %150 = vmatprep.subr.mxu0 0.0
    %151 = vmatpush2.msra.mxu0 0.0
    %152 = vmatprep.subr.mxu0 0.0
    %153 = vmatpush2.msra.mxu0 0.0
    %154 = vmatprep.subr.mxu0 0.0
    %155 = vmatpush2.msra.mxu0 0.0
    %156 = vmatprep.subr.mxu0 0.0
    %157 = vmatpush2.msra.mxu0 0.0
    %158 = vmatprep.subr.mxu0 0.0
    %159 = vmatpush2.msra.mxu0 0.0
    %160 = vmatprep.subr.mxu0 0.0
    %161 = vmatpush2.msra.mxu0 0.0
    %162 = vmatprep.subr.mxu0 0.0
    %163 = vmatpush2.msra.mxu0 0.0
    %164 = vmatprep.subr.mxu0 0.0
    %165 = vmatpush2.msra.mxu0 0.0
    %166 = vmatprep.subr.mxu0 0.0
    %167 = vmatpush2.msra.mxu0 0.0
    %168 = vmatprep.subr.mxu0 0.0
    %169 = vmatpush2.msra.mxu0 0.0
    %170 = vmatprep.subr.mxu0 0.0
    %171 = vmatpush2.msra.mxu0 0.0
    %172 = vmatprep.mubr.f32.mxu0 0.0
    %173 = vmatmul.mubr.f32.gmra.mxu0 %v102
    %v174 = vpop.f32.mrf.mxu0
    %v175 = vadd.f32 0.0, %v174
    %v176 = vpop.f32.mrf.mxu0
    %177 = vdwg.mxu0
    %v179 = vrot.slane %v175, 2
    %v181 = vadd.f32 %v175, %v179
    %v182 = vsub.f32 0.0, %v181
    %v183 = vmul.f32 %v182, 1.442695
    %v184 = vpow.pop %v183
    %v185 = vadd.f32 %v184, 1.0
    %v186 = vrcp.pop %v185
    %v187 = vmul.f32 1.0, %v186
    %vm188 = vcmask 517120
    %189 = vst.msk [vmem:[#allocation2] sm:$0x3] %vm188, %v187
    // Predicated region
    $region14: #{channel_attention_pallas.3} parent=1 // pred_check
      _
    $region15: #{channel_attention_pallas.3} parent=1 // pred_check_branch
      %191 = sbr.rel (0) target = $region17
    $region16: #{channel_attention_pallas.3} parent=1 // pred_region
      %s193 = ssub.s32 32, 32
      %194 = vsyncadd [#allocation3], %s193
      %s196 = sshll.u32 [#allocation2], 4
      %s197 = int_to_ptr.vmem [resolvable:$true] %s196
      %199 = dma.vmem_to_hbm [thread:$0]  %s197, 32, %s3, [#allocation3]
    $region17: #{channel_attention_pallas.3} parent=1 // pred_fallthru
      _
    // Predicated region
    $region18: #{channel_attention_pallas.3} parent=1 // pred_check
      _
    $region19: #{channel_attention_pallas.3} parent=1 // pred_check_branch
      %201 = sbr.rel (0) target = $region21
    $region20: #{channel_attention_pallas.3} parent=1 // pred_region
      %202 = dma.done [#allocation3], 32
    $region21: #{channel_attention_pallas.3} parent=1 // pred_fallthru
      _
    %203 = vsyncpa [#allocation3], 1

// kernel: channel_attention_pallas.2
$region0: #{channel_attention_pallas.2}
  #allocation0 [shape = 'u32[]', space=smem, size = 0x4, offset = 0x4, fixed_abs, tag = 'smem constant byte address 0x4 - core index']
  #allocation1 [shape = 'u32[144,128]{1,0:T(1,128)}', space=vmem, size = 0x12000, scoped, tag = 'internal scratch']
  %s0 = inlined_call_operand.vmem [shape: f32[2,64,256], index: 0, kind: input, shape index: {}]
  %s1 = inlined_call_operand.vmem [shape: f32[2,1,64], index: 1, kind: output, shape index: {0}]
  %s2 = inlined_call_operand.vmem [shape: f32[2,1,64], index: 2, kind: output, shape index: {1}]
  %3 = xla_tuple %s1, %s2
  %s4 = sld [smem:[#allocation0]]
  $region22: #{channel_attention_pallas.2} parent=0
    _
  %s6 = ssub.s32 1, %s4
  %s7 = scalar_select 0, %s6, %s4
  // Predicated region
  $region2: #{channel_attention_pallas.2} parent=0 // pred_check
    _
  $region3: #{channel_attention_pallas.2} parent=0 // pred_check_branch
    %9 = sbr.rel (0) target = $region5
  $region4: #{channel_attention_pallas.2} parent=0 // pred_region
    _
  $region5: #{channel_attention_pallas.2} parent=0 // pred_fallthru
    _
  %v10 = vld [vmem:[%s0] sm:$0xff]
  %v11 = vld [vmem:[%s0 + $0x8] sm:$0xff]
  %v12 = vld [vmem:[%s0 + $0x10] sm:$0xff]
  %v13 = vld [vmem:[%s0 + $0x18] sm:$0xff]
  %v14 = vld [vmem:[%s0 + $0x20] sm:$0xff]
  %v15 = vld [vmem:[%s0 + $0x28] sm:$0xff]
  %v16 = vld [vmem:[%s0 + $0x30] sm:$0xff]
  %v17 = vld [vmem:[%s0 + $0x38] sm:$0xff]
  %v18 = vld [vmem:[%s0 + $0x40] sm:$0xff]
  %v19 = vld [vmem:[%s0 + $0x48] sm:$0xff]
  %v20 = vld [vmem:[%s0 + $0x50] sm:$0xff]
  %v21 = vld [vmem:[%s0 + $0x58] sm:$0xff]
  %v22 = vld [vmem:[%s0 + $0x60] sm:$0xff]
  %v23 = vld [vmem:[%s0 + $0x68] sm:$0xff]
  %v24 = vld [vmem:[%s0 + $0x70] sm:$0xff]
  %v25 = vld [vmem:[%s0 + $0x78] sm:$0xff]
  %v26 = vld [vmem:[%s0 + $0x80] sm:$0xff]
  %v27 = vld [vmem:[%s0 + $0x88] sm:$0xff]
  %v28 = vld [vmem:[%s0 + $0x90] sm:$0xff]
  %v29 = vld [vmem:[%s0 + $0x98] sm:$0xff]
  %v30 = vld [vmem:[%s0 + $0xa0] sm:$0xff]
  %v31 = vld [vmem:[%s0 + $0xa8] sm:$0xff]
  %v32 = vld [vmem:[%s0 + $0xb0] sm:$0xff]
  %v33 = vld [vmem:[%s0 + $0xb8] sm:$0xff]
  %v34 = vld [vmem:[%s0 + $0xc0] sm:$0xff]
  %v35 = vld [vmem:[%s0 + $0xc8] sm:$0xff]
  %v36 = vld [vmem:[%s0 + $0xd0] sm:$0xff]
  %v37 = vld [vmem:[%s0 + $0xd8] sm:$0xff]
  %v38 = vld [vmem:[%s0 + $0xe0] sm:$0xff]
  %v39 = vld [vmem:[%s0 + $0xe8] sm:$0xff]
  %v40 = vld [vmem:[%s0 + $0xf0] sm:$0xff]
  %v41 = vld [vmem:[%s0 + $0xf8] sm:$0xff]
  %v42 = vadd.f32 %v10, %v11
  %43 = vadd.xlane.f32.xlu0 %v42
  %v44 = vpop.xlane.xlu0 %43
  %v45 = vadd.f32 %v12, %v13
  %46 = vadd.xlane.f32.xlu0 %v45
  %v47 = vpop.xlane.xlu0 %46
  %v48 = vadd.f32 %v14, %v15
  %49 = vadd.xlane.f32.xlu0 %v48
  %v50 = vpop.xlane.xlu0 %49
  %v51 = vadd.f32 %v16, %v17
  %52 = vadd.xlane.f32.xlu0 %v51
  %v53 = vpop.xlane.xlu0 %52
  %v54 = vadd.f32 %v18, %v19
  %55 = vadd.xlane.f32.xlu0 %v54
  %v56 = vpop.xlane.xlu0 %55
  %v57 = vadd.f32 %v20, %v21
  %58 = vadd.xlane.f32.xlu0 %v57
  %v59 = vpop.xlane.xlu0 %58
  %v60 = vadd.f32 %v22, %v23
  %61 = vadd.xlane.f32.xlu0 %v60
  %v62 = vpop.xlane.xlu0 %61
  %v63 = vadd.f32 %v24, %v25
  %64 = vadd.xlane.f32.xlu0 %v63
  %v65 = vpop.xlane.xlu0 %64
  %v66 = vadd.f32 %v26, %v27
  %67 = vadd.xlane.f32.xlu0 %v66
  %v68 = vpop.xlane.xlu0 %67
  %v69 = vadd.f32 %v28, %v29
  %70 = vadd.xlane.f32.xlu0 %v69
  %v71 = vpop.xlane.xlu0 %70
  %v72 = vadd.f32 %v30, %v31
  %73 = vadd.xlane.f32.xlu0 %v72
  %v74 = vpop.xlane.xlu0 %73
  %v75 = vadd.f32 %v32, %v33
  %76 = vadd.xlane.f32.xlu0 %v75
  %v77 = vpop.xlane.xlu0 %76
  %v78 = vadd.f32 %v34, %v35
  %79 = vadd.xlane.f32.xlu0 %v78
  %v80 = vpop.xlane.xlu0 %79
  %v81 = vadd.f32 %v36, %v37
  %82 = vadd.xlane.f32.xlu0 %v81
  %v83 = vpop.xlane.xlu0 %82
  %v84 = vadd.f32 %v38, %v39
  %85 = vadd.xlane.f32.xlu0 %v84
  %v86 = vpop.xlane.xlu0 %85
  %v87 = vadd.f32 %v40, %v41
  %88 = vadd.xlane.f32.xlu0 %v87
  %v89 = vpop.xlane.xlu0 %88
  %v90 = vmul.f32 %v44, 0.00390625
  %v91 = vmul.f32 %v47, 0.00390625
  %v92 = vmul.f32 %v50, 0.00390625
  %v93 = vmul.f32 %v53, 0.00390625
  %v94 = vmul.f32 %v56, 0.00390625
  %v95 = vmul.f32 %v59, 0.00390625
  %v96 = vmul.f32 %v62, 0.00390625
  %v97 = vmul.f32 %v65, 0.00390625
  %v98 = vmul.f32 %v68, 0.00390625
  %v99 = vmul.f32 %v71, 0.00390625
  %v100 = vmul.f32 %v74, 0.00390625
  %v101 = vmul.f32 %v77, 0.00390625
  %v102 = vmul.f32 %v80, 0.00390625
  %v103 = vmul.f32 %v83, 0.00390625
  %v104 = vmul.f32 %v86, 0.00390625
  %v105 = vmul.f32 %v89, 0.00390625
  %v106 = vmax.f32 %v10, %v11
  %107 = vmax.xlane.f32.xlu0 %v106
  %v108 = vpop.xlane.xlu0 %107
  %v109 = vmax.f32 %v12, %v13
  %110 = vmax.xlane.f32.xlu0 %v109
  %v111 = vpop.xlane.xlu0 %110
  %v112 = vmax.f32 %v14, %v15
  %113 = vmax.xlane.f32.xlu0 %v112
  %v114 = vpop.xlane.xlu0 %113
  %v115 = vmax.f32 %v16, %v17
  %116 = vmax.xlane.f32.xlu0 %v115
  %v117 = vpop.xlane.xlu0 %116
  %v118 = vmax.f32 %v18, %v19
  %119 = vmax.xlane.f32.xlu0 %v118
  %v120 = vpop.xlane.xlu0 %119
  %v121 = vmax.f32 %v20, %v21
  %122 = vmax.xlane.f32.xlu0 %v121
  %v123 = vpop.xlane.xlu0 %122
  %v124 = vmax.f32 %v22, %v23
  %125 = vmax.xlane.f32.xlu0 %v124
  %v126 = vpop.xlane.xlu0 %125
  %v127 = vmax.f32 %v24, %v25
  %128 = vmax.xlane.f32.xlu0 %v127
  %v129 = vpop.xlane.xlu0 %128
  %v130 = vmax.f32 %v26, %v27
  %131 = vmax.xlane.f32.xlu0 %v130
  %v132 = vpop.xlane.xlu0 %131
  %v133 = vmax.f32 %v28, %v29
  %134 = vmax.xlane.f32.xlu0 %v133
  %v135 = vpop.xlane.xlu0 %134
  %v136 = vmax.f32 %v30, %v31
  %137 = vmax.xlane.f32.xlu0 %v136
  %v138 = vpop.xlane.xlu0 %137
  %v139 = vmax.f32 %v32, %v33
  %140 = vmax.xlane.f32.xlu0 %v139
  %v141 = vpop.xlane.xlu0 %140
  %v142 = vmax.f32 %v34, %v35
  %143 = vmax.xlane.f32.xlu0 %v142
  %v144 = vpop.xlane.xlu0 %143
  %v145 = vmax.f32 %v36, %v37
  %146 = vmax.xlane.f32.xlu0 %v145
  %v147 = vpop.xlane.xlu0 %146
  %v148 = vmax.f32 %v38, %v39
  %149 = vmax.xlane.f32.xlu0 %v148
  %v150 = vpop.xlane.xlu0 %149
  %v151 = vmax.f32 %v40, %v41
  %152 = vmax.xlane.f32.xlu0 %v151
  %v153 = vpop.xlane.xlu0 %152
  %v170 = vlaneseq
  %v171 = vand.u32 %v170, 127
  %v172 = vlaneseq
  %v173 = vshrl.u32 %v172, 7
  %v174 = vsub.s32 %v171, %v173
  %v175 = vrot.slane %v90, %v174
  %v176 = vadd.s32 %v171, 4294967288
  %v177 = vlaneseq
  %v178 = vshrl.u32 %v177, 7
  %v179 = vsub.s32 %v176, %v178
  %v180 = vrot.slane %v91, %v179
  %vm181 = vcmask 130112
  %v182 = vsel %vm181, %v180, %v175
  %v183 = vadd.s32 %v171, 4294967280
  %v184 = vlaneseq
  %v185 = vshrl.u32 %v184, 7
  %v186 = vsub.s32 %v183, %v185
  %v187 = vrot.slane %v92, %v186
  %vm188 = vcmask 195712
  %v189 = vsel %vm188, %v187, %v182
  %v190 = vadd.s32 %v171, 4294967272
  %v191 = vlaneseq
  %v192 = vshrl.u32 %v191, 7
  %v193 = vsub.s32 %v190, %v192
  %v194 = vrot.slane %v93, %v193
  %vm195 = vcmask 261312
  %v196 = vsel %vm195, %v194, %v189
  %v197 = vadd.s32 %v171, 4294967264
  %v198 = vlaneseq
  %v199 = vshrl.u32 %v198, 7
  %v200 = vsub.s32 %v197, %v199
  %v201 = vrot.slane %v94, %v200
  %vm202 = vcmask 326912
  %v203 = vsel %vm202, %v201, %v196
  %v204 = vadd.s32 %v171, 4294967256
  %v205 = vlaneseq
  %v206 = vshrl.u32 %v205, 7
  %v207 = vsub.s32 %v204, %v206
  %v208 = vrot.slane %v95, %v207
  %vm209 = vcmask 392512
  %v210 = vsel %vm209, %v208, %v203
  %v211 = vadd.s32 %v171, 4294967248
  %v212 = vlaneseq
  %v213 = vshrl.u32 %v212, 7
  %v214 = vsub.s32 %v211, %v213
  %v215 = vrot.slane %v96, %v214
  %vm216 = vcmask 458112
  %v217 = vsel %vm216, %v215, %v210
  %v218 = vadd.s32 %v171, 4294967240
  %v219 = vlaneseq
  %v220 = vshrl.u32 %v219, 7
  %v221 = vsub.s32 %v218, %v220
  %v222 = vrot.slane %v97, %v221
  %vm223 = vcmask 523712
  %v224 = vsel %vm223, %v222, %v217
  %v225 = vlaneseq
  %v226 = vshrl.u32 %v225, 7
  %v227 = vsub.s32 %v171, %v226
  %v228 = vrot.slane %v98, %v227
  %v229 = vlaneseq
  %v230 = vshrl.u32 %v229, 7
  %v231 = vsub.s32 %v176, %v230
  %v232 = vrot.slane %v99, %v231
  %v233 = vsel %vm181, %v232, %v228
  %v234 = vlaneseq
  %v235 = vshrl.u32 %v234, 7
  %v236 = vsub.s32 %v183, %v235
  %v237 = vrot.slane %v100, %v236
  %v238 = vsel %vm188, %v237, %v233
  %v239 = vlaneseq
  %v240 = vshrl.u32 %v239, 7
  %v241 = vsub.s32 %v190, %v240
  %v242 = vrot.slane %v101, %v241
  %v243 = vsel %vm195, %v242, %v238
  %v244 = vlaneseq
  %v245 = vshrl.u32 %v244, 7
  %v246 = vsub.s32 %v197, %v245
  %v247 = vrot.slane %v102, %v246
  %v248 = vsel %vm202, %v247, %v243
  %v249 = vlaneseq
  %v250 = vshrl.u32 %v249, 7
  %v251 = vsub.s32 %v204, %v250
  %v252 = vrot.slane %v103, %v251
  %v253 = vsel %vm209, %v252, %v248
  %v254 = vlaneseq
  %v255 = vshrl.u32 %v254, 7
  %v256 = vsub.s32 %v211, %v255
  %v257 = vrot.slane %v104, %v256
  %v258 = vsel %vm216, %v257, %v253
  %v259 = vlaneseq
  %v260 = vshrl.u32 %v259, 7
  %v261 = vsub.s32 %v218, %v260
  %v262 = vrot.slane %v105, %v261
  %v263 = vsel %vm223, %v262, %v258
  %vm266 = vcmask 516096
  %267 = vst.msk [vmem:[%s1] sm:$0x1] %vm266, %v224
  %268 = vst.msk [vmem:[%s1 + $0x1] sm:$0x1] %vm266, %v263
  %v285 = vlaneseq
  %v286 = vshrl.u32 %v285, 7
  %v287 = vsub.s32 %v171, %v286
  %v288 = vrot.slane %v108, %v287
  %v289 = vlaneseq
  %v290 = vshrl.u32 %v289, 7
  %v291 = vsub.s32 %v176, %v290
  %v292 = vrot.slane %v111, %v291
  %v293 = vsel %vm181, %v292, %v288
  %v294 = vlaneseq
  %v295 = vshrl.u32 %v294, 7
  %v296 = vsub.s32 %v183, %v295
  %v297 = vrot.slane %v114, %v296
  %v298 = vsel %vm188, %v297, %v293
  %v299 = vlaneseq
  %v300 = vshrl.u32 %v299, 7
  %v301 = vsub.s32 %v190, %v300
  %v302 = vrot.slane %v117, %v301
  %v303 = vsel %vm195, %v302, %v298
  %v304 = vlaneseq
  %v305 = vshrl.u32 %v304, 7
  %v306 = vsub.s32 %v197, %v305
  %v307 = vrot.slane %v120, %v306
  %v308 = vsel %vm202, %v307, %v303
  %v309 = vlaneseq
  %v310 = vshrl.u32 %v309, 7
  %v311 = vsub.s32 %v204, %v310
  %v312 = vrot.slane %v123, %v311
  %v313 = vsel %vm209, %v312, %v308
  %v314 = vlaneseq
  %v315 = vshrl.u32 %v314, 7
  %v316 = vsub.s32 %v211, %v315
  %v317 = vrot.slane %v126, %v316
  %v318 = vsel %vm216, %v317, %v313
  %v319 = vlaneseq
  %v320 = vshrl.u32 %v319, 7
  %v321 = vsub.s32 %v218, %v320
  %v322 = vrot.slane %v129, %v321
  %v323 = vsel %vm223, %v322, %v318
  %v324 = vlaneseq
  %v325 = vshrl.u32 %v324, 7
  %v326 = vsub.s32 %v171, %v325
  %v327 = vrot.slane %v132, %v326
  %v328 = vlaneseq
  %v329 = vshrl.u32 %v328, 7
  %v330 = vsub.s32 %v176, %v329
  %v331 = vrot.slane %v135, %v330
  %v332 = vsel %vm181, %v331, %v327
  %v333 = vlaneseq
  %v334 = vshrl.u32 %v333, 7
  %v335 = vsub.s32 %v183, %v334
  %v336 = vrot.slane %v138, %v335
  %v337 = vsel %vm188, %v336, %v332
  %v338 = vlaneseq
  %v339 = vshrl.u32 %v338, 7
  %v340 = vsub.s32 %v190, %v339
  %v341 = vrot.slane %v141, %v340
  %v342 = vsel %vm195, %v341, %v337
  %v343 = vlaneseq
  %v344 = vshrl.u32 %v343, 7
  %v345 = vsub.s32 %v197, %v344
  %v346 = vrot.slane %v144, %v345
  %v347 = vsel %vm202, %v346, %v342
  %v348 = vlaneseq
  %v349 = vshrl.u32 %v348, 7
  %v350 = vsub.s32 %v204, %v349
  %v351 = vrot.slane %v147, %v350
  %v352 = vsel %vm209, %v351, %v347
  %v353 = vlaneseq
  %v354 = vshrl.u32 %v353, 7
  %v355 = vsub.s32 %v211, %v354
  %v356 = vrot.slane %v150, %v355
  %v357 = vsel %vm216, %v356, %v352
  %v358 = vlaneseq
  %v359 = vshrl.u32 %v358, 7
  %v360 = vsub.s32 %v218, %v359
  %v361 = vrot.slane %v153, %v360
  %v362 = vsel %vm223, %v361, %v357
  %365 = vst.msk [vmem:[%s2] sm:$0x1] %vm266, %v323
  %366 = vst.msk [vmem:[%s2 + $0x1] sm:$0x1] %vm266, %v362
  // Predicated region
  $region6: #{channel_attention_pallas.2} parent=0 // pred_check
    _
  $region7: #{channel_attention_pallas.2} parent=0 // pred_check_branch
    %368 = sbr.rel (0) target = $region9
  $region8: #{channel_attention_pallas.2} parent=0 // pred_region
    _
  $region9: #{channel_attention_pallas.2} parent=0 // pred_fallthru
    _
  // Predicated region
  $region10: #{channel_attention_pallas.2} parent=0 // pred_check
    _
  $region11: #{channel_attention_pallas.2} parent=0 // pred_check_branch
    %370 = sbr.rel (0) target = $region13
  $region12: #{channel_attention_pallas.2} parent=0 // pred_region
    _
  $region13: #{channel_attention_pallas.2} parent=0 // pred_fallthru
    _
  // Predicated region
  $region14: #{channel_attention_pallas.2} parent=0 // pred_check
    _
  $region15: #{channel_attention_pallas.2} parent=0 // pred_check_branch
    %372 = sbr.rel (0) target = $region17
  $region16: #{channel_attention_pallas.2} parent=0 // pred_region
    _
  $region17: #{channel_attention_pallas.2} parent=0 // pred_fallthru
    _
  // Predicated region
  $region18: #{channel_attention_pallas.2} parent=0 // pred_check
    _
  $region19: #{channel_attention_pallas.2} parent=0 // pred_check_branch
    %374 = sbr.rel (0) target = $region21
  $region20: #{channel_attention_pallas.2} parent=0 // pred_region
    _
  $region21: #{channel_attention_pallas.2} parent=0 // pred_fallthru
    _

</llo_original>
